<compile_context>
chip_gen: v7x
topology: tpu7x:2x2x1
jax: 0.10.0
libtpu: 0.0.40
codegen_flags: <defaults>
</compile_context>

<pallas_src>
import math
from functools import partial

import jax
import jax.numpy as jnp
from jax.experimental import pallas as pl
from jax.experimental.pallas import tpu as pltpu

LN_EPS = 1e-5
NEG_INF = -1e9      # additive mask stand-in for -inf (exp underflows to 0)

# bf16 MXU inputs -> ~2-3x matmul throughput on v5e/v6e/v7x and halved weight
# DMA; accumulation stays f32 via preferred_element_type.
MXU_DTYPE = jnp.bfloat16

FUSE_VMEM_BUDGET = 32 << 20   # above this, fused kernels fall back to gridded linears


def _mxu(x):
    return x if x.dtype == MXU_DTYPE else x.astype(MXU_DTYPE)


def _pick_tile(dim, candidates):
    """Largest candidate tile that evenly divides `dim`; else the full dim."""
    for c in candidates:
        if c <= dim and dim % c == 0:
            return c
    return dim


def _row_tile(m):       # sublane axis: multiple of 8 (or full dim)
    return _pick_tile(m, (512, 256, 128, 64, 32, 16, 8))


def _lane_tile(n):      # lane axis: multiple of 128 (or full dim)
    return _pick_tile(n, (512, 256, 128))


# --------------------------- VMEM budgeting -----------------------------------

def _pad(n, m):
    return -(-n // m) * m


def _tile_bytes(shape, elem_bytes):
    """Approximate VMEM footprint of a tile with (8,128) tiling padding."""
    if len(shape) == 1:
        return _pad(shape[0], 128) * elem_bytes
    lead = 1
    for d in shape[:-2]:
        lead *= d
    return lead * _pad(shape[-2], 8) * _pad(shape[-1], 128) * elem_bytes


def _vmem_estimate(tiles):
    """tiles: iterable of (shape, elem_bytes, n_buffers)."""
    return sum(_tile_bytes(s, eb) * nb for s, eb, nb in tiles)


def _mosaic_params(sem, tiles):
    est = _vmem_estimate(tiles)
    limit = int(min(max(2 * est, 16 << 20), 64 << 20))   # 64 MiB cap = v7x physical
    return pltpu.CompilerParams(dimension_semantics=sem, vmem_limit_bytes=limit)


# --------------------------- kernels -----------------------------------------

def _linear_kernel(x_ref, w_ref, b_ref, o_ref, acc_ref, *, activation):
    k = pl.program_id(2)

    @pl.when(k == 0)
    def _():
        acc_ref[...] = jnp.zeros(acc_ref.shape, acc_ref.dtype)

    acc_ref[...] += jnp.dot(_mxu(x_ref[...]), _mxu(w_ref[...]),
                            preferred_element_type=jnp.float32)

    @pl.when(k == pl.num_programs(2) - 1)
    def _():
        y = acc_ref[...] + b_ref[...].astype(jnp.float32)
        if activation == "relu":
            y = jnp.maximum(y, 0.0)
        o_ref[...] = y.astype(o_ref.dtype)


def _ln_kernel(x_ref, g_ref, b_ref, o_ref, *, eps):
    x = x_ref[...].astype(jnp.float32)
    mean = jnp.mean(x, axis=-1, keepdims=True)
    var = jnp.mean((x - mean) ** 2, axis=-1, keepdims=True)
    y = (x - mean) * jax.lax.rsqrt(var + eps)
    o_ref[...] = (y * g_ref[...] + b_ref[...]).astype(o_ref.dtype)


def _add_ln_kernel(x_ref, y_ref, g_ref, b_ref, o_ref, *, eps):
    # LN(x + y)
    z = x_ref[...].astype(jnp.float32) + y_ref[...].astype(jnp.float32)
    mean = jnp.mean(z, axis=-1, keepdims=True)
    var = jnp.mean((z - mean) ** 2, axis=-1, keepdims=True)
    zn = (z - mean) * jax.lax.rsqrt(var + eps)
    o_ref[...] = (zn * g_ref[...] + b_ref[...]).astype(o_ref.dtype)


def _proj_add_ln_kernel(a_ref, w_ref, b_ref, r_ref, g_ref, bb_ref, o_ref, *, eps):
    # LN( residual + (a @ W_o + b_o) )
    y = jnp.dot(_mxu(a_ref[...]), _mxu(w_ref[...]),
                preferred_element_type=jnp.float32) + b_ref[...]
    x = y + r_ref[...].astype(jnp.float32)
    mean = jnp.mean(x, axis=-1, keepdims=True)
    var = jnp.mean((x - mean) ** 2, axis=-1, keepdims=True)
    xn = (x - mean) * jax.lax.rsqrt(var + eps)
    o_ref[...] = (xn * g_ref[...] + bb_ref[...]).astype(o_ref.dtype)


def _ffn_add_ln_kernel(x_ref, w1_ref, b1_ref, w2_ref, b2_ref, g_ref, bb_ref,
                       o_ref, *, eps):
    # LN( x + relu(x @ W1 + b1) @ W2 + b2 )   -- hidden never leaves VMEM
    x = x_ref[...].astype(jnp.float32)
    h = jnp.dot(_mxu(x), _mxu(w1_ref[...]),
                preferred_element_type=jnp.float32) + b1_ref[...]
    h = jnp.maximum(h, 0.0)
    y = jnp.dot(_mxu(h), _mxu(w2_ref[...]),
                preferred_element_type=jnp.float32) + b2_ref[...]
    z = x + y
    mean = jnp.mean(z, axis=-1, keepdims=True)
    var = jnp.mean((z - mean) ** 2, axis=-1, keepdims=True)
    zn = (z - mean) * jax.lax.rsqrt(var + eps)
    o_ref[...] = (zn * g_ref[...] + bb_ref[...]).astype(o_ref.dtype)


def _posenc_kernel(x_ref, pe_ref, o_ref, *, scale):
    # x * sqrt(d_model) + pe (pe broadcasts over the batch axis)
    o_ref[...] = x_ref[...] * scale + pe_ref[...]


def _flash_attn_kernel(kpm_ref, q_ref, k_ref, v_ref, o_ref,
                       m_sc, l_sc, acc_sc, *,
                       causal, nhead, dh, tq, tk):
    qi = pl.program_id(1)
    ki = pl.program_id(2)

    @pl.when(ki == 0)
    def _():
        m_sc[...] = jnp.full(m_sc.shape, NEG_INF, m_sc.dtype)
        l_sc[...] = jnp.zeros(l_sc.shape, l_sc.dtype)
        acc_sc[...] = jnp.zeros(acc_sc.shape, acc_sc.dtype)

    def compute():
        # (tq, E) -> (tq, nhead, dh); one head-batched matmul instead of a
        # per-head unrolled loop of sub-128 lane slices.
        q = q_ref[...].astype(MXU_DTYPE).reshape(tq, nhead, dh)
        k = k_ref[...].astype(MXU_DTYPE).reshape(tk, nhead, dh)
        v = v_ref[...].astype(MXU_DTYPE).reshape(tk, nhead, dh)
        kp = kpm_ref[0]                                       # (1, tk) additive

        # scores: batch over heads, contract dh -> (nhead, tq, tk)
        s = jax.lax.dot_general(q, k, (((2,), (2,)), ((1,), (1,))),
                                preferred_element_type=jnp.float32)
        s = s + kp[None, :, :]
        if causal:
            row = qi * tq + jax.lax.broadcasted_iota(jnp.int32, (tq, tk), 0)
            col = ki * tk + jax.lax.broadcasted_iota(jnp.int32, (tq, tk), 1)
            s = s + jnp.where(col <= row, 0.0, NEG_INF)[None, :, :]

        m_prev = m_sc[...]                                    # (nhead, tq)
        m_new = jnp.maximum(m_prev, jnp.max(s, axis=-1))
        alpha = jnp.exp(m_prev - m_new)
        p = jnp.exp(s - m_new[:, :, None])                    # (nhead, tq, tk)
        l_sc[...] = alpha * l_sc[...] + jnp.sum(p, axis=-1)
        # p @ v per head: contract tk, batch nhead -> (nhead, tq, dh)
        pv = jax.lax.dot_general(p.astype(MXU_DTYPE), v,
                                 (((2,), (0,)), ((0,), (1,))),
                                 preferred_element_type=jnp.float32)
        acc_sc[...] = alpha[:, :, None] * acc_sc[...] + pv
        m_sc[...] = m_new

    if causal:
        # skip tiles entirely above the diagonal (fully masked)
        pl.when(ki * tk <= qi * tq + tq - 1)(compute)
    else:
        compute()

    @pl.when(ki == pl.num_programs(2) - 1)
    def _():
        inv = pl.reciprocal(l_sc[...], approx=True)           # (nhead, tq), EUP
        out = acc_sc[...] * inv[:, :, None]                   # (nhead, tq, dh)
        for h in range(nhead):                                # epilogue-only stores
            o_ref[:, h * dh:(h + 1) * dh] = out[h].astype(o_ref.dtype)


# --------------------------- wrappers -----------------------------------------

def linear(x, w, b, activation=None):
    M, K = x.shape
    N = w.shape[1]
    tm, tn, tk = _row_tile(M), _lane_tile(N), _lane_tile(K)
    grid = (M // tm, N // tn, K // tk)
    wb = w.dtype.itemsize
    tiles = [((tm, tk), 4, 2), ((tk, tn), wb, 2), ((1, tn), 4, 2),
             ((tm, tn), 4, 2), ((tm, tn), 4, 1)]
    return pl.pallas_call(
        partial(_linear_kernel, activation=activation),
        out_shape=jax.ShapeDtypeStruct((M, N), x.dtype),
        grid_spec=pltpu.PrefetchScalarGridSpec(
            num_scalar_prefetch=0,
            grid=grid,
            in_specs=[
                pl.BlockSpec((tm, tk), lambda i, j, k: (i, k)),
                pl.BlockSpec((tk, tn), lambda i, j, k: (k, j)),
                pl.BlockSpec((1, tn), lambda i, j, k: (0, j)),
            ],
            out_specs=pl.BlockSpec((tm, tn), lambda i, j, k: (i, j)),
            scratch_shapes=[pltpu.VMEM((tm, tn), jnp.float32)],
        ),
        compiler_params=_mosaic_params(("parallel", "parallel", "arbitrary"), tiles),
    )(x, w, b)


def layernorm(x2d, g, b):
    M, E = x2d.shape
    tm = _row_tile(M)
    tiles = [((tm, E), 4, 2), ((1, E), 4, 4), ((tm, E), 4, 2)]
    return pl.pallas_call(
        partial(_ln_kernel, eps=LN_EPS),
        out_shape=jax.ShapeDtypeStruct((M, E), x2d.dtype),
        grid_spec=pltpu.PrefetchScalarGridSpec(
            num_scalar_prefetch=0,
            grid=(M // tm,),
            in_specs=[pl.BlockSpec((tm, E), lambda i: (i, 0)),
                      pl.BlockSpec((1, E), lambda i: (0, 0)),
                      pl.BlockSpec((1, E), lambda i: (0, 0))],
            out_specs=pl.BlockSpec((tm, E), lambda i: (i, 0)),
        ),
        compiler_params=_mosaic_params(("parallel",), tiles),
    )(x2d, g, b)


def add_ln(x2d, y2d, g, b):
    M, E = x2d.shape
    tm = _row_tile(M)
    tiles = [((tm, E), 4, 2), ((tm, E), 4, 2), ((1, E), 4, 4), ((tm, E), 4, 2)]
    return pl.pallas_call(
        partial(_add_ln_kernel, eps=LN_EPS),
        out_shape=jax.ShapeDtypeStruct((M, E), x2d.dtype),
        grid_spec=pltpu.PrefetchScalarGridSpec(
            num_scalar_prefetch=0,
            grid=(M // tm,),
            in_specs=[pl.BlockSpec((tm, E), lambda i: (i, 0)),
                      pl.BlockSpec((tm, E), lambda i: (i, 0)),
                      pl.BlockSpec((1, E), lambda i: (0, 0)),
                      pl.BlockSpec((1, E), lambda i: (0, 0))],
            out_specs=pl.BlockSpec((tm, E), lambda i: (i, 0)),
        ),
        compiler_params=_mosaic_params(("parallel",), tiles),
    )(x2d, y2d, g, b)


def proj_add_ln(a2d, wo, bo, resid2d, g, b):
    M, E = a2d.shape
    tm = _row_tile(M)
    wb = wo.dtype.itemsize
    tiles = [((tm, E), 4, 2), ((E, E), wb, 2), ((1, E), 4, 6),
             ((tm, E), 4, 2), ((tm, E), 4, 2)]
    if _vmem_estimate(tiles) > FUSE_VMEM_BUDGET:
        # weights too big to keep VMEM-resident (e.g. v7x @ large E): gridded path
        y = linear(a2d, wo, bo)
        return add_ln(resid2d, y, g, b)
    return pl.pallas_call(
        partial(_proj_add_ln_kernel, eps=LN_EPS),
        out_shape=jax.ShapeDtypeStruct((M, E), a2d.dtype),
        grid_spec=pltpu.PrefetchScalarGridSpec(
            num_scalar_prefetch=0,
            grid=(M // tm,),
            in_specs=[pl.BlockSpec((tm, E), lambda i: (i, 0)),
                      pl.BlockSpec(wo.shape, lambda i: (0, 0)),
                      pl.BlockSpec((1, E), lambda i: (0, 0)),
                      pl.BlockSpec((tm, E), lambda i: (i, 0)),
                      pl.BlockSpec((1, E), lambda i: (0, 0)),
                      pl.BlockSpec((1, E), lambda i: (0, 0))],
            out_specs=pl.BlockSpec((tm, E), lambda i: (i, 0)),
        ),
        compiler_params=_mosaic_params(("parallel",), tiles),
    )(a2d, wo, bo, resid2d, g, b)


def ffn_add_ln(x2d, w1, b1, w2, b2, g, b):
    M, E = x2d.shape
    dff = w1.shape[1]
    tm = _row_tile(M)
    # cap the row tile so the (tm, dff) f32 hidden stays modest (v7x VMEM)
    while tm >= 16 and tm % 16 == 0 and tm * dff * 4 > (4 << 20):
        tm //= 2
    wb = w1.dtype.itemsize
    tiles = [((tm, E), 4, 2), ((E, dff), wb, 2), ((1, dff), 4, 2),
             ((dff, E), wb, 2), ((1, E), 4, 6), ((tm, E), 4, 2),
             ((tm, dff), 4, 2)]
    if _vmem_estimate(tiles) > FUSE_VMEM_BUDGET:
        # weights/hidden too big to keep VMEM-resident: gridded fallback
        h = linear(x2d, w1, b1, activation="relu")
        y = linear(h, w2, b2)
        return add_ln(x2d, y, g, b)
    return pl.pallas_call(
        partial(_ffn_add_ln_kernel, eps=LN_EPS),
        out_shape=jax.ShapeDtypeStruct((M, E), x2d.dtype),
        grid_spec=pltpu.PrefetchScalarGridSpec(
            num_scalar_prefetch=0,
            grid=(M // tm,),
            in_specs=[pl.BlockSpec((tm, E), lambda i: (i, 0)),
                      pl.BlockSpec((E, dff), lambda i: (0, 0)),
                      pl.BlockSpec((1, dff), lambda i: (0, 0)),
                      pl.BlockSpec((dff, E), lambda i: (0, 0)),
                      pl.BlockSpec((1, E), lambda i: (0, 0)),
                      pl.BlockSpec((1, E), lambda i: (0, 0)),
                      pl.BlockSpec((1, E), lambda i: (0, 0))],
            out_specs=pl.BlockSpec((tm, E), lambda i: (i, 0)),
        ),
        compiler_params=_mosaic_params(("parallel",), tiles),
    )(x2d, w1, b1, w2, b2, g, b)


def posenc(x, pe, scale):
    N, L, E = x.shape
    tiles = [((1, L, E), 4, 2), ((L, E), 4, 2), ((1, L, E), 4, 2)]
    return pl.pallas_call(
        partial(_posenc_kernel, scale=scale),
        out_shape=jax.ShapeDtypeStruct((N, L, E), x.dtype),
        grid_spec=pltpu.PrefetchScalarGridSpec(
            num_scalar_prefetch=0,
            grid=(N,),
            in_specs=[pl.BlockSpec((1, L, E), lambda b: (b, 0, 0)),
                      pl.BlockSpec((L, E), lambda b: (0, 0))],
            out_specs=pl.BlockSpec((1, L, E), lambda b: (b, 0, 0)),
        ),
        compiler_params=_mosaic_params(("parallel",), tiles),
    )(x, pe)


def flash_attention(q2d, k2d, v2d, kpm, *, N, Lq, Lk, nhead, causal):
    """q2d: (N*Lq, E) rows = n*Lq + l; k2d/v2d: (N*Lk, E); kpm: (N, 1, Lk) additive.
    1/sqrt(dh) is already folded into the Q projection weights."""
    E = q2d.shape[1]
    dh = E // nhead
    tq = _pick_tile(Lq, (128, 64, 32, 16, 8))
    tk = _pick_tile(Lk, (512, 256, 128))
    nq, nk = Lq // tq, Lk // tk
    kernel = partial(_flash_attn_kernel, causal=causal,
                     nhead=nhead, dh=dh, tq=tq, tk=tk)
    tiles = [((1, 1, tk), 4, 2), ((tq, E), 4, 2), ((tk, E), 4, 2),
             ((tk, E), 4, 2), ((tq, E), 4, 2),
             ((nhead, tq), 4, 1), ((nhead, tq), 4, 1), ((nhead, tq, dh), 4, 1),
             ((nhead, tq, tk), 4, 2)]     # in-kernel score/prob temporaries
    return pl.pallas_call(
        kernel,
        out_shape=jax.ShapeDtypeStruct((N * Lq, E), q2d.dtype),
        grid_spec=pltpu.PrefetchScalarGridSpec(
            num_scalar_prefetch=0,
            grid=(N, nq, nk),
            in_specs=[
                pl.BlockSpec((1, 1, tk), lambda b, qi, ki: (b, 0, ki)),
                pl.BlockSpec((tq, E), lambda b, qi, ki: (b * nq + qi, 0)),
                pl.BlockSpec((tk, E), lambda b, qi, ki: (b * nk + ki, 0)),
                pl.BlockSpec((tk, E), lambda b, qi, ki: (b * nk + ki, 0)),
            ],
            out_specs=pl.BlockSpec((tq, E), lambda b, qi, ki: (b * nq + qi, 0)),
            scratch_shapes=[pltpu.VMEM((nhead, tq), jnp.float32),
                            pltpu.VMEM((nhead, tq), jnp.float32),
                            pltpu.VMEM((nhead, tq, dh), jnp.float32)],
        ),
        compiler_params=_mosaic_params(("parallel", "parallel", "arbitrary"), tiles),
    )(kpm, q2d, k2d, v2d)


# --------------------------- model glue ---------------------------------------

def _additive_kpm(mask, N, L):
    # NOTE: fully-padded rows softly attend over raw scores (NEG_INF additive,
    # not a hard -inf); differs from PyTorch only in that degenerate edge case.
    if mask is None:
        return jnp.zeros((N, 1, L), jnp.float32)
    return jnp.where(mask, NEG_INF, 0.0).astype(jnp.float32)[:, None, :]


def encoder_layer(x2d, p, N, S, nhead, kpm):
    E = x2d.shape[1]
    sa = p["self_attn"]
    qkv = linear(x2d, sa["w_qkv"], sa["b_qkv"])           # fused QKV (one matmul)
    q, k, v = qkv[:, :E], qkv[:, E:2 * E], qkv[:, 2 * E:]
    a = flash_attention(q, k, v, kpm, N=N, Lq=S, Lk=S, nhead=nhead, causal=False)
    x2d = proj_add_ln(a, sa["wo"], sa["bo"], x2d, p["norm1_g"], p["norm1_b"])
    x2d = ffn_add_ln(x2d, p["lin1_w"], p["lin1_b"], p["lin2_w"], p["lin2_b"],
                     p["norm2_g"], p["norm2_b"])
    return x2d


def decoder_layer(x2d, mem2d, p, N, T, S, nhead, tgt_kpm, mem_kpm):
    E = x2d.shape[1]
    sa = p["self_attn"]
    qkv = linear(x2d, sa["w_qkv"], sa["b_qkv"])
    q, k, v = qkv[:, :E], qkv[:, E:2 * E], qkv[:, 2 * E:]
    a = flash_attention(q, k, v, tgt_kpm, N=N, Lq=T, Lk=T, nhead=nhead, causal=True)
    x2d = proj_add_ln(a, sa["wo"], sa["bo"], x2d, p["norm1_g"], p["norm1_b"])

    ca = p["cross_attn"]
    q = linear(x2d, ca["w_q"], ca["b_q"])
    kv = linear(mem2d, ca["w_kv"], ca["b_kv"])            # fused K/V of memory
    k, v = kv[:, :E], kv[:, E:]
    a = flash_attention(q, k, v, mem_kpm, N=N, Lq=T, Lk=S, nhead=nhead, causal=False)
    x2d = proj_add_ln(a, ca["wo"], ca["bo"], x2d, p["norm2_g"], p["norm2_b"])

    x2d = ffn_add_ln(x2d, p["lin1_w"], p["lin1_b"], p["lin2_w"], p["lin2_b"],
                     p["norm3_g"], p["norm3_b"])
    return x2d


def transformer_forward(params, src, tgt,
                        src_key_padding_mask=None,
                        tgt_key_padding_mask=None,
                        memory_key_padding_mask=None):
    d_model, nhead = params["d_model"], params["nhead"]
    S, N, E = src.shape
    T = tgt.shape[0]
    scale = math.sqrt(d_model)

    # single entry transpose to batch-first; all later batch/head splits are
    # expressed through BlockSpec index_maps (lane-dense (rows, E) activations).
    src_bf = jnp.transpose(src, (1, 0, 2))                     # (N, S, E)
    # TODO(synk): embedding gather stays in XLA (irregular gather; no clean blocked Pallas form here).
    tgt_emb = jnp.take(params["embed"], jnp.transpose(tgt, (1, 0)), axis=0)  # (N, T, E)

    src_in = posenc(src_bf, params["pe"][:S], scale).reshape(N * S, E)
    tgt_in = posenc(tgt_emb, params["pe"][:T], scale).reshape(N * T, E)

    src_kpm = _additive_kpm(src_key_padding_mask, N, S)
    tgt_kpm = _additive_kpm(tgt_key_padding_mask, N, T)
    mem_kpm = _additive_kpm(memory_key_padding_mask, N, S)

    # encoder (post-LN, ReLU) + final encoder norm
    mem = src_in
    for lp in params["enc_layers"]:
        mem = encoder_layer(mem, lp, N, S, nhead, src_kpm)
    mem = layernorm(mem, params["enc_norm_g"], params["enc_norm_b"])

    # decoder (causal self-attn) + final decoder norm
    out = tgt_in
    for lp in params["dec_layers"]:
        out = decoder_layer(out, mem, lp, N, T, S, nhead, tgt_kpm, mem_kpm)
    out = layernorm(out, params["dec_norm_g"], params["dec_norm_b"])

    # fc: rows are already (n, t)-major -> (N, T, vocab), no transpose needed
    logits = linear(out, params["fc_w"], params["fc_b"])
    return logits.reshape(N, T, -1)


# --------------------------- parameter init -----------------------------------

def _dense(key, fan_in, fan_out):
    w = jax.random.normal(key, (fan_in, fan_out), jnp.float32) * 0.02
    b = jnp.zeros((1, fan_out), jnp.float32)
    return w.astype(MXU_DTYPE), b      # weights stored bf16 (MXU input dtype)


def _ln_params(E):
    return jnp.ones((1, E), jnp.float32), jnp.zeros((1, E), jnp.float32)


def _init_self_attn(key, E, nhead):
    k1, k2 = jax.random.split(key, 2)
    w_qkv = jax.random.normal(k1, (E, 3 * E), jnp.float32) * 0.02
    b_qkv = jnp.zeros((1, 3 * E), jnp.float32)
    # fold the 1/sqrt(dh) attention scale into the Q projection (identical math;
    # removes a per-k-step VPU multiply from the attention kernel).
    scale = 1.0 / math.sqrt(E // nhead)
    w_qkv = w_qkv.at[:, :E].multiply(scale)
    b_qkv = b_qkv.at[:, :E].multiply(scale)
    wo, bo = _dense(k2, E, E)
    return {"w_qkv": w_qkv.astype(MXU_DTYPE), "b_qkv": b_qkv, "wo": wo, "bo": bo}


def _init_cross_attn(key, E, nhead):
    kq, kkv, ko = jax.random.split(key, 3)
    w_q = jax.random.normal(kq, (E, E), jnp.float32) * 0.02
    b_q = jnp.zeros((1, E), jnp.float32)
    scale = 1.0 / math.sqrt(E // nhead)
    w_q = w_q * scale
    b_q = b_q * scale
    w_kv, b_kv = _dense(kkv, E, 2 * E)
    wo, bo = _dense(ko, E, E)
    return {"w_q": w_q.astype(MXU_DTYPE), "b_q": b_q,
            "w_kv": w_kv, "b_kv": b_kv, "wo": wo, "bo": bo}


def _init_enc_layer(key, E, dff, nhead):
    k0, k1, k2 = jax.random.split(key, 3)
    p = {"self_attn": _init_self_attn(k0, E, nhead)}
    p["lin1_w"], p["lin1_b"] = _dense(k1, E, dff)
    p["lin2_w"], p["lin2_b"] = _dense(k2, dff, E)
    p["norm1_g"], p["norm1_b"] = _ln_params(E)
    p["norm2_g"], p["norm2_b"] = _ln_params(E)
    return p


def _init_dec_layer(key, E, dff, nhead):
    k0, k1, k2, k3 = jax.random.split(key, 4)
    p = {"self_attn": _init_self_attn(k0, E, nhead),
         "cross_attn": _init_cross_attn(k1, E, nhead)}
    p["lin1_w"], p["lin1_b"] = _dense(k2, E, dff)
    p["lin2_w"], p["lin2_b"] = _dense(k3, dff, E)
    p["norm1_g"], p["norm1_b"] = _ln_params(E)
    p["norm2_g"], p["norm2_b"] = _ln_params(E)
    p["norm3_g"], p["norm3_b"] = _ln_params(E)
    return p


def init_params(key, vocab_size, d_model, nhead, num_encoder, num_decoder,
                dim_feedforward, max_seq):
    keys = jax.random.split(key, num_encoder + num_decoder + 3)
    params = {"d_model": d_model, "nhead": nhead}

    params["embed"] = jax.random.normal(keys[0], (vocab_size, d_model), jnp.float32)

    # sinusoidal positional encoding buffer: (max_seq, d_model)
    position = jnp.arange(max_seq, dtype=jnp.float32)[:, None]
    div_term = jnp.exp(jnp.arange(0, d_model, 2, dtype=jnp.float32)
                       * (-math.log(10000.0) / d_model))
    pe = jnp.zeros((max_seq, d_model), jnp.float32)
    pe = pe.at[:, 0::2].set(jnp.sin(position * div_term))
    pe = pe.at[:, 1::2].set(jnp.cos(position * div_term))
    params["pe"] = pe

    params["enc_layers"] = [_init_enc_layer(keys[1 + i], d_model, dim_feedforward, nhead)
                            for i in range(num_encoder)]
    params["dec_layers"] = [_init_dec_layer(keys[1 + num_encoder + i], d_model,
                                            dim_feedforward, nhead)
                            for i in range(num_decoder)]
    params["enc_norm_g"], params["enc_norm_b"] = _ln_params(d_model)
    params["dec_norm_g"], params["dec_norm_b"] = _ln_params(d_model)

    params["fc_w"], params["fc_b"] = _dense(keys[-1], d_model, vocab_size)
    return params


# --------------------------- demo ---------------------------------------------

if __name__ == "__main__":
    vocab_size = 32
    d_model = 64
    nhead = 4
    num_encoder = 2
    num_decoder = 2
    dim_feedforward = 128
    max_seq = 32
    S, T, N = 16, 16, 2   # src seq, tgt seq, batch

    key = jax.random.PRNGKey(0)
    kp, ks, kt = jax.random.split(key, 3)
    params = init_params(kp, vocab_size, d_model, nhead, num_encoder,
                         num_decoder, dim_feedforward, max_seq)

    src = jax.random.normal(ks, (S, N, d_model), jnp.float32)              # (W, N, C)
    tgt = jax.random.randint(kt, (T, N), 0, vocab_size, dtype=jnp.int32)   # (T, N)

    out = transformer_forward(params, src, tgt)
    out = jax.block_until_ready(out)

    assert out.shape == (N, T, vocab_size), out.shape
    assert bool(jnp.all(jnp.isfinite(out)))
    print("KERNEL_OK")
</pallas_src>

<mosaic_0001>
module attributes {stable_mosaic.version = 11 : i64} {
  func.func @_posenc_kernel(%arg0: i32, %arg1: memref<1x16x64xf32, #tpu.memory_space<vmem>>, %arg2: memref<16x64xf32, #tpu.memory_space<vmem>>, %arg3: memref<1x16x64xf32, #tpu.memory_space<vmem>>) attributes {dimension_semantics = [#tpu.dimension_semantics<parallel>], iteration_bounds = array<i64: 2>, scalar_prefetch = 0 : i64, scratch_operands = 0 : i64, tpu.core_type = #tpu.core_type<tc>, window_params = [{transform_indices = @transform_0, window_bounds = array<i64: 1, 16, 64>}, {pipeline_mode = #tpu.pipeline_mode<synchronous>, transform_indices = @transform_1, window_bounds = array<i64: 16, 64>}, {transform_indices = @transform_2, window_bounds = array<i64: 1, 16, 64>}]} {
    %c0 = arith.constant 0 : index
    %c0_0 = arith.constant 0 : index
    %c0_1 = arith.constant 0 : index
    %0 = vector.load %arg1[%c0, %c0_0, %c0_1] : memref<1x16x64xf32, #tpu.memory_space<vmem>>, vector<1x16x64xf32>
    %cst = arith.constant 8.000000e+00 : f32
    %1 = vector.broadcast %cst : f32 to vector<1x16x64xf32>
    %2 = arith.mulf %0, %1 : vector<1x16x64xf32>
    %c0_2 = arith.constant 0 : index
    %c0_3 = arith.constant 0 : index
    %3 = vector.load %arg2[%c0_2, %c0_3] : memref<16x64xf32, #tpu.memory_space<vmem>>, vector<16x64xf32>
    %4 = vector.shape_cast %3 : vector<16x64xf32> to vector<1x16x64xf32>
    %5 = arith.addf %2, %4 : vector<1x16x64xf32>
    %c0_4 = arith.constant 0 : index
    %c0_5 = arith.constant 0 : index
    %c0_6 = arith.constant 0 : index
    %6 = vector.load %arg3[%c0_4, %c0_5, %c0_6] : memref<1x16x64xf32, #tpu.memory_space<vmem>>, vector<1x16x64xf32>
    tpu.vector_store %arg3[%c0_4, %c0_5, %c0_6], %5 {strides = array<i32>} : memref<1x16x64xf32, #tpu.memory_space<vmem>>, vector<1x16x64xf32>,
    return
  }
  func.func @transform_0(%arg0: i32) -> (i32, i32, i32) {
    %c0_i32 = arith.constant 0 : i32
    %c0_i32_0 = arith.constant 0 : i32
    %c0_i32_1 = arith.constant 0 : i32
    return %arg0, %c0_i32, %c0_i32_0 : i32, i32, i32
  }
  func.func @transform_1(%arg0: i32) -> (i32, i32) {
    %c0_i32 = arith.constant 0 : i32
    %c0_i32_0 = arith.constant 0 : i32
    %c0_i32_1 = arith.constant 0 : i32
    return %c0_i32, %c0_i32_0 : i32, i32
  }
  func.func @transform_2(%arg0: i32) -> (i32, i32, i32) {
    %c0_i32 = arith.constant 0 : i32
    %c0_i32_0 = arith.constant 0 : i32
    %c0_i32_1 = arith.constant 0 : i32
    return %arg0, %c0_i32, %c0_i32_0 : i32, i32, i32
  }
}

</mosaic_0001>

<llo_original>
// kernel: tpu_custom_call.1
$region0: #{tpu_custom_call.1}
  #allocation0 [shape = 'u32[]', space=smem, size = 0x4, offset = 0x4, fixed_abs, tag = 'smem constant byte address 0x4 - core index']
  #allocation1 [shape = 'u32[144,128]{1,0:T(1,128)}', space=vmem, size = 0x12000, scoped, tag = 'internal scratch']
  %s0 = inlined_call_operand.hbm [shape: f32[2,16,64], index: 0, kind: input, shape index: {}]
  %s1 = inlined_call_operand.hbm [shape: f32[16,64], index: 1, kind: input, shape index: {}]
  %s2 = inlined_call_operand.hbm [shape: f32[2,16,64], index: 2, kind: output, shape index: {}]
  %s3 = sld [smem:[#allocation0]]
  $region49: #{tpu_custom_call.1} parent=0
    _
  %s5 = ssub.s32 1, %s3
  %s6 = scalar_select 0, %s5, %s3
  $region1: #{tpu_custom_call.1} parent=0
    #allocation2 [shape = 'u8[16384]{0}', space=vmem, size = 0x4000, scoped, tag = 'input window, operand 0']
    #allocation3 [shape = 's32[2]{0}', space=sflag, size = 0x8, scoped, tag = 'scoped memory for tpu_custom_call.1']
    #allocation4 [shape = 's32[2]{0}', space=sflag, size = 0x8, scoped, tag = 'scoped memory for tpu_custom_call.1']
    #allocation5 [shape = 'u8[8192]{0}', space=vmem, size = 0x2000, scoped, tag = 'input window, operand 1, single buffered']
    #allocation6 [shape = 's32[1]{0}', space=sflag, size = 0x4, scoped, tag = 'scoped memory for tpu_custom_call.1']
    #allocation7 [shape = 'u8[16384]{0}', space=vmem, size = 0x4000, scoped, tag = 'output window, operand 0']
    %7 = vsyncpa [#allocation3], 0
    %s8 = scalar_lea.sflag [#allocation3], 1
    %9 = vsyncpa %s8, 0
    %10 = vsyncpa [#allocation6], 0
    %11 = vsyncpa [#allocation4], 0
    %s12 = scalar_lea.sflag [#allocation4], 1
    %13 = vsyncpa %s12, 0
    loop: start=0, step=1, limit=4
    $region2: #{tpu_custom_call.1} parent=1 // loop_pre_header
      _
    $region3: #{tpu_custom_call.1} parent=1 // loop_header
      %s15 = sphi 0, %s19
      %p16 = scmp.ge.s32.totalorder %s15, 4
      %s25 = sphi 0, %s27
      %s28 = sphi 0, %s25
      %s29 = sphi 0, %s28
      %s45 = sphi 0, %s29
      %s49 = sphi 0, %s49
      %s51 = sphi 0, %s49
      %s52 = sphi 0, %s51
      %s66 = sphi 0, %s52
      %s72 = sphi 0, %s74
      %s75 = sphi 0, %s72
      %s76 = sphi 0, %s75
      %s92 = sphi 0, %s76
    $region4: #{tpu_custom_call.1} parent=1 // loop_header_branch
      %18 = sbr.rel (%p16) target = $region8
    $region5: #{tpu_custom_call.1} parent=1 // loop_body
      %s20 = ssub.s32 %s15, 1
      %s21 = ssub.s32 %s15, 2
      %s22 = sadd.s32 %s15, 1
      %s23 = ssub.s32 %s15, %s22
      %p24 = scmp.eq.s32.totalorder %s23, 0
      %s26 = sadd.s32 %s25, 1
      %s27 = scalar_select %p24, %s25, %s26
      %p30 = pneg %p24
      %p31 = scmp.eq.s32.totalorder %s15, 1
      %p32 = por %p30, %p31
      %p33 = scmp.ne.s32.totalorder %s25, %s28
      %p34 = scmp.eq.s32.totalorder %s15, 0
      %p35 = por %p33, %p34
      %p36 = scmp.ne.s32.totalorder %s25, %s28
      %p37 = scmp.eq.s32.totalorder %s20, 1
      %p38 = por %p36, %p37
      %p39 = scmp.ne.s32.totalorder %s28, %s29
      %p40 = scmp.eq.s32.totalorder %s20, 0
      %p41 = por %p39, %p40
      %p42 = scmp.ne.s32.totalorder %s28, %s29
      %p43 = scmp.eq.s32.totalorder %s21, 1
      %p44 = por %p42, %p43
      %p46 = scmp.ne.s32.totalorder %s29, %s45
      %p47 = scmp.eq.s32.totalorder %s21, 0
      %p48 = por %p46, %p47
      %s50 = sadd.s32 %s49, 1
      %p53 = scmp.eq.s32.totalorder %s15, 1
      %p54 = scmp.ne.s32.totalorder %s49, %s51
      %p55 = scmp.eq.s32.totalorder %s15, 0
      %p56 = por %p54, %p55
      %p57 = scmp.ne.s32.totalorder %s49, %s51
      %p58 = scmp.eq.s32.totalorder %s20, 1
      %p59 = por %p57, %p58
      %p60 = scmp.ne.s32.totalorder %s51, %s52
      %p61 = scmp.eq.s32.totalorder %s20, 0
      %p62 = por %p60, %p61
      %p63 = scmp.ne.s32.totalorder %s51, %s52
      %p64 = scmp.eq.s32.totalorder %s21, 1
      %p65 = por %p63, %p64
      %p67 = scmp.ne.s32.totalorder %s52, %s66
      %p68 = scmp.eq.s32.totalorder %s21, 0
      %p69 = por %p67, %p68
      %s70 = ssub.s32 %s15, %s22
      %p71 = scmp.eq.s32.totalorder %s70, 0
      %s73 = sadd.s32 %s72, 1
      %s74 = scalar_select %p71, %s72, %s73
      %p77 = pneg %p71
      %p78 = scmp.eq.s32.totalorder %s15, 1
      %p79 = por %p77, %p78
      %p80 = scmp.ne.s32.totalorder %s72, %s75
      %p81 = scmp.eq.s32.totalorder %s15, 0
      %p82 = por %p80, %p81
      %p83 = scmp.ne.s32.totalorder %s72, %s75
      %p84 = scmp.eq.s32.totalorder %s20, 1
      %p85 = por %p83, %p84
      %p86 = scmp.ne.s32.totalorder %s75, %s76
      %p87 = scmp.eq.s32.totalorder %s20, 0
      %p88 = por %p86, %p87
      %p89 = scmp.ne.s32.totalorder %s75, %s76
      %p90 = scmp.eq.s32.totalorder %s21, 1
      %p91 = por %p89, %p90
      %p93 = scmp.ne.s32.totalorder %s76, %s92
      %p94 = scmp.eq.s32.totalorder %s21, 0
      %p95 = por %p93, %p94
      %p96 = scmp.le.s32.totalorder 1, %s15
      %p97 = scmp.lt.s32.totalorder %s15, 3
      %p98 = pnand %p96, %p97
      %p99 = pneg %p98
      // Predicated region
      $region9: #{tpu_custom_call.1} parent=5 // pred_check
        _
      $region10: #{tpu_custom_call.1} parent=5 // pred_check_branch
        %101 = sbr.rel (%p98) target = $region12
      $region11: #{tpu_custom_call.1} parent=5 // pred_region
        %s102 = ssub.s32 %s15, 1
        // Predicated region
        $region13: #{tpu_custom_call.1} parent=11 // pred_check
          %p103 = pneg %p62
        $region14: #{tpu_custom_call.1} parent=11 // pred_check_branch
          %105 = sbr.rel (%p103) target = $region16
        $region15: #{tpu_custom_call.1} parent=11 // pred_region
          %s107 = ssub.s32 256, 256
          %108 = vsyncadd [#allocation6], %s107
          %s109 = sshll.u32 [#allocation5], 4
          %s110 = int_to_ptr.vmem [resolvable:$true] %s109
          %115 = dma.hbm_to_vmem [thread:$0]  %s1, 256, %s110, [#allocation6], 128, 128, 8
        $region16: #{tpu_custom_call.1} parent=11 // pred_fallthru
          _
      $region12: #{tpu_custom_call.1} parent=5 // pred_fallthru
        _
      %p116 = scmp.lt.s32.totalorder %s15, 2
      // Predicated region
      $region17: #{tpu_custom_call.1} parent=5 // pred_check
        %p117 = pneg %p116
      $region18: #{tpu_custom_call.1} parent=5 // pred_check_branch
        %119 = sbr.rel (%p117) target = $region20
      $region19: #{tpu_custom_call.1} parent=5 // pred_region
        // Predicated region
        $region21: #{tpu_custom_call.1} parent=19 // pred_check
          %p120 = pneg %p35
        $region22: #{tpu_custom_call.1} parent=19 // pred_check_branch
          %122 = sbr.rel (%p120) target = $region24
        $region23: #{tpu_custom_call.1} parent=19 // pred_region
          %s123 = sand.u32 %s25, 1
          %s124 = scalar_lea.sflag [#allocation3], %s123
          %s125 = sand.u32 %s25, 1
          %s126 = smul.addr %s125, 16
          %s127 = scalar_lea.vmem [#allocation2], %s126
          %s129 = ssub.s32 256, 256
          %130 = vsyncadd %s124, %s129
          %s131 = smul.addr %s15, 2
          %s132 = smul.addr %s131, 128
          %s133 = scalar_lea.hbm %s0, %s132
          %s134 = sshll.u32 %s127, 4
          %s135 = int_to_ptr.vmem [resolvable:$true] %s134
          %140 = dma.hbm_to_vmem [thread:$0]  %s133, 256, %s135, %s124, 128, 128, 8
        $region24: #{tpu_custom_call.1} parent=19 // pred_fallthru
          _
      $region20: #{tpu_custom_call.1} parent=5 // pred_fallthru
        _
      %p141 = scmp.le.s32.totalorder 1, %s15
      %p142 = scmp.lt.s32.totalorder %s15, 3
      %p143 = pnand %p141, %p142
      %p144 = pneg %p143
      // Predicated region
      $region25: #{tpu_custom_call.1} parent=5 // pred_check
        _
      $region26: #{tpu_custom_call.1} parent=5 // pred_check_branch
        %146 = sbr.rel (%p143) target = $region28
      $region27: #{tpu_custom_call.1} parent=5 // pred_region
        %s147 = ssub.s32 %s15, 1
        %s148 = sand.u32 %s28, 1
        %s149 = scalar_lea.sflag [#allocation3], %s148
        %s150 = sand.u32 %s28, 1
        %s151 = smul.addr %s150, 16
        %s152 = scalar_lea.vmem [#allocation2], %s151
        // Predicated region
        $region29: #{tpu_custom_call.1} parent=27 // pred_check
          %p153 = pneg %p41
        $region30: #{tpu_custom_call.1} parent=27 // pred_check_branch
          %155 = sbr.rel (%p153) target = $region32
        $region31: #{tpu_custom_call.1} parent=27 // pred_region
          %156 = dma.done %s149, 256
        $region32: #{tpu_custom_call.1} parent=27 // pred_fallthru
          _
        // Predicated region
        $region33: #{tpu_custom_call.1} parent=27 // pred_check
          %p157 = pneg %p62
        $region34: #{tpu_custom_call.1} parent=27 // pred_check_branch
          %159 = sbr.rel (%p157) target = $region36
        $region35: #{tpu_custom_call.1} parent=27 // pred_region
          %160 = dma.done [#allocation6], 256
        $region36: #{tpu_custom_call.1} parent=27 // pred_fallthru
          _
        %s161 = sand.u32 %s28, 1
        %s162 = scalar_lea.sflag [#allocation3], %s161
        %s163 = sand.u32 %s28, 1
        %s164 = smul.addr %s163, 16
        %s165 = scalar_lea.vmem [#allocation2], %s164
        %p166 = pneg %p41
        %p167 = pneg %p38
        %p168 = pneg %p62
        %p169 = pneg %p59
        %p170 = pneg %p88
        %p171 = pneg %p85
        %s172 = sand.u32 %s75, 1
        %s173 = scalar_lea.sflag [#allocation4], %s172
        %s174 = sand.u32 %s75, 1
        %s175 = smul.addr %s174, 16
        %s176 = scalar_lea.vmem [#allocation7], %s175
        %v177 = vld [vmem:[%s152] sm:$0xff]
        %v178 = vld [vmem:[%s152 + $0x8] sm:$0xff]
        %v179 = vmul.f32 %v177, 8.0
        %v180 = vmul.f32 %v178, 8.0
        %v181 = vld [vmem:[#allocation5] sm:$0xff]
        %v182 = vld [vmem:[#allocation5 + $0x8] sm:$0xff]
        %v183 = vadd.f32 %v179, %v181
        %v184 = vadd.f32 %v180, %v182
        %vm185 = vcmask 523264
        %186 = vst.msk [vmem:[%s176] sm:$0xff] %vm185, %v183
        %187 = vst.msk [vmem:[%s176 + $0x8] sm:$0xff] %vm185, %v184
        %s188 = sand.u32 %s75, 1
        %s189 = scalar_lea.sflag [#allocation4], %s188
        %s190 = sand.u32 %s75, 1
        %s191 = smul.addr %s190, 16
        %s192 = scalar_lea.vmem [#allocation7], %s191
        // Predicated region
        $region37: #{tpu_custom_call.1} parent=27 // pred_check
          %p193 = pneg %p85
        $region38: #{tpu_custom_call.1} parent=27 // pred_check_branch
          %195 = sbr.rel (%p193) target = $region40
        $region39: #{tpu_custom_call.1} parent=27 // pred_region
          %s197 = ssub.s32 256, 256
          %198 = vsyncadd %s189, %s197
          %s199 = smul.addr %s20, 2
          %s200 = smul.addr %s199, 128
          %s201 = scalar_lea.hbm %s2, %s200
          %s202 = sshll.u32 %s192, 4
          %s203 = int_to_ptr.vmem [resolvable:$true] %s202
          %208 = dma.vmem_to_hbm [thread:$0]  %s203, 256, %s201, %s189, 128, 128, 8
        $region40: #{tpu_custom_call.1} parent=27 // pred_fallthru
          _
      $region28: #{tpu_custom_call.1} parent=5 // pred_fallthru
        _
      %p209 = scmp.le.s32.totalorder 2, %s15
      // Predicated region
      $region41: #{tpu_custom_call.1} parent=5 // pred_check
        %p210 = pneg %p209
      $region42: #{tpu_custom_call.1} parent=5 // pred_check_branch
        %212 = sbr.rel (%p210) target = $region44
      $region43: #{tpu_custom_call.1} parent=5 // pred_region
        %s213 = ssub.s32 %s15, 2
        // Predicated region
        $region45: #{tpu_custom_call.1} parent=43 // pred_check
          %p214 = pneg %p91
        $region46: #{tpu_custom_call.1} parent=43 // pred_check_branch
          %216 = sbr.rel (%p214) target = $region48
        $region47: #{tpu_custom_call.1} parent=43 // pred_region
          %s217 = sand.u32 %s76, 1
          %s218 = scalar_lea.sflag [#allocation4], %s217
          %s219 = sand.u32 %s76, 1
          %s220 = smul.addr %s219, 16
          %s221 = scalar_lea.vmem [#allocation7], %s220
          %222 = dma.done %s218, 256
        $region48: #{tpu_custom_call.1} parent=43 // pred_fallthru
          _
      $region44: #{tpu_custom_call.1} parent=5 // pred_fallthru
        _
    $region6: #{tpu_custom_call.1} parent=1 // loop_footer
      %s19 = sadd.s32 1, %s15
    $region7: #{tpu_custom_call.1} parent=1 // loop_footer_branch
      %14 = sbr.rel target = $region3
    $region8: #{tpu_custom_call.1} parent=1 // loop_exit
      _
    %223 = vsyncpa [#allocation3], 1
    %s224 = scalar_lea.sflag [#allocation3], 1
    %225 = vsyncpa %s224, 1
    %226 = vsyncpa [#allocation6], 1
    %227 = vsyncpa [#allocation4], 1
    %s228 = scalar_lea.sflag [#allocation4], 1
    %229 = vsyncpa %s228, 1

</llo_original>
